<compile_context>
chip_gen: v7x
topology: tpu7x:2x2x1
jax: 0.10.0
libtpu: 0.0.40
codegen_flags: <defaults>
</compile_context>

<pallas_src>
import jax
import jax.numpy as jnp
from jax import lax
from jax.experimental import pallas as pl
from jax.experimental.pallas import tpu as pltpu

_MAX_ROW_TILE = 8192
_MAX_D_TILE = 2048
_N_CHUNKS = 8                      # static sub-chunks per row block
_SMALL_BYPASS_ELEMS = 16384        # below this, plain JAX beats launch cost


def _round_up(x: int, m: int) -> int:
    return ((x + m - 1) // m) * m


def _sublane_packing(dtype) -> int:
    # 8 sublanes per 32-bit vreg row; sub-32-bit dtypes pack along sublanes
    # (16 rows for 16-bit, 32 rows for 8-bit).
    bits = jnp.dtype(dtype).itemsize * 8
    return max(8, 256 // bits)


def _vmem_budgets():
    """(input block budget bytes, vmem_limit_bytes) per TPU generation."""
    try:
        info = pltpu.get_tpu_info()
        vmem = getattr(info, "vmem_capacity_bytes", None)
    except Exception:
        vmem = None
    if vmem is None:
        return 4 * 1024 * 1024, 32 * 1024 * 1024           # safe fallback
    if vmem >= 100 * 1024 * 1024:                           # v5e / v6e (128 MiB)
        return 8 * 1024 * 1024, 64 * 1024 * 1024
    return 8 * 1024 * 1024, 40 * 1024 * 1024                # v7x (64 MiB / TC)


def _pick_tiles(N, D, dtype, max_row_tile, max_d_tile, block_budget):
    itemsize = jnp.dtype(dtype).itemsize
    pack = _sublane_packing(dtype)
    row_align = _N_CHUNKS * pack     # 8 pack-aligned chunks per block

    # --- D tiling: lane-dense (multiple of 128).  Guarantee >= 2 blocks on
    # the "parallel" D axis when D >= 256 so both v7x TensorCores get work.
    d128 = _round_up(D, 128)
    d_cap = max(128, min(max_d_tile, d128))
    if d128 >= 256:
        d_cap = min(d_cap, _round_up(d128 // 2, 128))
    d_tile = max(128, (d_cap // 128) * 128)

    # --- Row tiling: biggest aligned tile within the VMEM block budget.
    rows_by_vmem = max(row_align, block_budget // (d_tile * itemsize))
    row_tile = min(max_row_tile, rows_by_vmem, _round_up(N, row_align))
    row_tile = max(row_align, (row_tile // row_align) * row_align)
    return row_tile, d_tile


def _make_kernel(n_rows: int, row_tile: int, d_tile: int, ragged_n: bool):
    inv_n = 1.0 / float(n_rows)
    chunk_rows = row_tile // _N_CHUNKS       # multiple of the sublane packing

    def kernel(z_ref, o_ref, acc_ref):
        i = pl.program_id(1)                 # reduction over rows (innermost)
        last = pl.num_programs(1) - 1

        @pl.when(i == 0)
        def _():
            acc_ref[...] = jnp.zeros_like(acc_ref)

        def accumulate(masked: bool):
            # Stream the block through the VPU in 8 static sub-chunks: each
            # chunk is upcast + reduced over its leading axis (pure vreg adds)
            # into a register partial; acc_ref is touched once per grid step.
            if masked:
                row = lax.broadcasted_iota(jnp.int32, (chunk_rows, d_tile), 0)
                base = i * row_tile
            partial = jnp.zeros((8, d_tile), jnp.float32)
            for c in range(_N_CHUNKS):
                start = c * chunk_rows
                zc = z_ref[start:start + chunk_rows, :].astype(jnp.float32)
                if masked:
                    valid = (base + (start + row)) < n_rows
                    # jnp.where (not multiply): OOB rows may hold NaN/Inf.
                    zc = jnp.where(valid, zc, 0.0)
                partial = partial + zc.reshape(
                    chunk_rows // 8, 8, d_tile).sum(axis=0)
            acc_ref[...] += partial

        if ragged_n:
            @pl.when(i != last)
            def _():
                accumulate(False)

            @pl.when(i == last)
            def _():
                accumulate(True)
        else:
            accumulate(False)

        @pl.when(i == last)
        def _():
            # One cross-sublane (XLU) reduce per D block, then scale+sigmoid.
            col_sum = jnp.sum(acc_ref[...], axis=0, keepdims=True)
            o_ref[...] = jax.nn.sigmoid(col_sum * inv_n).astype(o_ref.dtype)

    return kernel


def summarizer_forward(
    z: jax.Array,
    *,
    max_row_tile: int = _MAX_ROW_TILE,
    max_d_tile: int = _MAX_D_TILE,
) -> jax.Array:
    """sigmoid(mean(z, axis=0)) via a Pallas TPU kernel.  z: (N, D) -> (D,)."""
    N, D = z.shape
    # torch returns a float tensor; never cast sigmoid output to int.
    out_dtype = z.dtype if jnp.issubdtype(z.dtype, jnp.floating) else jnp.float32

    # Tiny inputs: pallas_call launch/pipeline setup exceeds the work.
    if N * D < _SMALL_BYPASS_ELEMS:
        mean = jnp.mean(z.astype(jnp.float32), axis=0)
        return jax.nn.sigmoid(mean).astype(out_dtype)

    block_budget, vmem_limit = _vmem_budgets()
    row_tile, d_tile = _pick_tiles(
        N, D, z.dtype, max_row_tile, max_d_tile, block_budget
    )

    grid = (pl.cdiv(D, d_tile), pl.cdiv(N, row_tile))   # (parallel D, reduce N)
    ragged_n = (N % row_tile) != 0

    out = pl.pallas_call(
        _make_kernel(N, row_tile, d_tile, ragged_n),
        out_shape=jax.ShapeDtypeStruct((1, D), out_dtype),
        grid_spec=pltpu.PrefetchScalarGridSpec(
            num_scalar_prefetch=0,
            grid=grid,
            in_specs=[pl.BlockSpec((row_tile, d_tile), lambda j, i: (i, j))],
            out_specs=pl.BlockSpec((1, d_tile), lambda j, i: (0, j)),
            scratch_shapes=[pltpu.VMEM((8, d_tile), jnp.float32)],
        ),
        compiler_params=pltpu.CompilerParams(
            dimension_semantics=("parallel", "arbitrary"),
            vmem_limit_bytes=vmem_limit,
        ),
    )(z)
    return out[0, :D]   # (D,) — matches torch's z.mean(dim=0) shape


if __name__ == "__main__":
    key = jax.random.PRNGKey(0)
    k1, k2, k3 = jax.random.split(key, 3)

    # 1) f32, ragged N and D: single masked N block, 2 D blocks (the second
    #    partially out-of-bounds -> garbage lanes sliced off in the wrapper).
    N1, D1 = 300, 200
    z1 = jax.random.normal(k1, (N1, D1), dtype=jnp.float32)
    y1 = jax.block_until_ready(summarizer_forward(z1))
    ref1 = jax.nn.sigmoid(jnp.mean(z1, axis=0))
    assert y1.shape == (D1,)
    assert jnp.allclose(y1, ref1, atol=1e-5, rtol=1e-5)

    # 2) bf16 with small tile caps to force a multi-block (3 x 4) grid:
    #    exercises the parallel D axis, per-D-block accumulator reset,
    #    multi-step reduction and the 16-row sublane packing for bf16.
    N2, D2 = 512, 384
    z2 = jax.random.normal(k2, (N2, D2), dtype=jnp.bfloat16)
    y2 = jax.block_until_ready(
        summarizer_forward(z2, max_row_tile=128, max_d_tile=128)
    )
    ref2 = jax.nn.sigmoid(jnp.mean(z2.astype(jnp.float32), axis=0)).astype(
        jnp.bfloat16
    )
    assert y2.shape == (D2,)
    assert jnp.allclose(
        y2.astype(jnp.float32), ref2.astype(jnp.float32), atol=2e-2, rtol=2e-2
    )

    # 3) tiny input -> plain-JAX bypass path (launch overhead > work).
    N3, D3 = 16, 32
    z3 = jax.random.normal(k3, (N3, D3), dtype=jnp.float32)
    y3 = jax.block_until_ready(summarizer_forward(z3))
    ref3 = jax.nn.sigmoid(jnp.mean(z3, axis=0))
    assert y3.shape == (D3,)
    assert jnp.allclose(y3, ref3, atol=1e-6, rtol=1e-6)

    print("KERNEL_OK")
</pallas_src>

<mosaic_0001>
module attributes {stable_mosaic.version = 11 : i64} {
  func.func @kernel(%arg0: i32, %arg1: i32, %arg2: memref<320x128xf32, #tpu.memory_space<vmem>>, %arg3: memref<1x128xf32, #tpu.memory_space<vmem>>, %arg4: memref<8x128xf32, #tpu.memory_space<vmem>>) attributes {dimension_semantics = [#tpu.dimension_semantics<parallel>, #tpu.dimension_semantics<arbitrary>], iteration_bounds = array<i64: 2, 1>, scalar_prefetch = 0 : i64, scratch_operands = 1 : i64, tpu.core_type = #tpu.core_type<tc>, window_params = [{transform_indices = @transform_0, window_bounds = array<i64: 320, 128>}, {transform_indices = @transform_1, window_bounds = array<i64: 1, 128>}]} {
    %c0_i32 = arith.constant 0 : i32
    %0 = arith.cmpi eq, %arg1, %c0_i32 : i32
    %1 = arith.extui %0 : i1 to i32
    %c0_i32_0 = arith.constant 0 : i32
    %2 = arith.cmpi ne, %1, %c0_i32_0 : i32
    scf.if %2 {
      %cst = arith.constant 0.000000e+00 : f32
      %12 = vector.broadcast %cst : f32 to vector<8x128xf32>
      %c0 = arith.constant 0 : index
      %c0_7 = arith.constant 0 : index
      %13 = vector.load %arg4[%c0, %c0_7] : memref<8x128xf32, #tpu.memory_space<vmem>>, vector<8x128xf32>
      tpu.vector_store %arg4[%c0, %c0_7], %12 {strides = array<i32>} : memref<8x128xf32, #tpu.memory_space<vmem>>, vector<8x128xf32>,
    } else {
    }
    %c0_i32_1 = arith.constant 0 : i32
    %3 = arith.cmpi ne, %arg1, %c0_i32_1 : i32
    %4 = arith.extui %3 : i1 to i32
    %c0_i32_2 = arith.constant 0 : i32
    %5 = arith.cmpi ne, %4, %c0_i32_2 : i32
    scf.if %5 {
      %cst = arith.constant 0.000000e+00 : f32
      %12 = vector.broadcast %cst : f32 to vector<8x128xf32>
      %c0 = arith.constant 0 : index
      %c0_7 = arith.constant 0 : index
      %13 = vector.load %arg2[%c0, %c0_7] : memref<320x128xf32, #tpu.memory_space<vmem>>, vector<40x128xf32>
      %14 = vector.shape_cast %13 : vector<40x128xf32> to vector<5x8x128xf32>
      %cst_8 = arith.constant dense<0.000000e+00> : vector<8x128xf32>
      %15 = vector.multi_reduction <add>, %14, %cst_8 [0] : vector<5x8x128xf32> to vector<8x128xf32>
      %16 = arith.addf %12, %15 : vector<8x128xf32>
      %c40 = arith.constant 40 : index
      %c0_9 = arith.constant 0 : index
      %17 = vector.load %arg2[%c40, %c0_9] : memref<320x128xf32, #tpu.memory_space<vmem>>, vector<40x128xf32>
      %18 = vector.shape_cast %17 : vector<40x128xf32> to vector<5x8x128xf32>
      %cst_10 = arith.constant dense<0.000000e+00> : vector<8x128xf32>
      %19 = vector.multi_reduction <add>, %18, %cst_10 [0] : vector<5x8x128xf32> to vector<8x128xf32>
      %20 = arith.addf %16, %19 : vector<8x128xf32>
      %c80 = arith.constant 80 : index
      %c0_11 = arith.constant 0 : index
      %21 = vector.load %arg2[%c80, %c0_11] : memref<320x128xf32, #tpu.memory_space<vmem>>, vector<40x128xf32>
      %22 = vector.shape_cast %21 : vector<40x128xf32> to vector<5x8x128xf32>
      %cst_12 = arith.constant dense<0.000000e+00> : vector<8x128xf32>
      %23 = vector.multi_reduction <add>, %22, %cst_12 [0] : vector<5x8x128xf32> to vector<8x128xf32>
      %24 = arith.addf %20, %23 : vector<8x128xf32>
      %c120 = arith.constant 120 : index
      %c0_13 = arith.constant 0 : index
      %25 = vector.load %arg2[%c120, %c0_13] : memref<320x128xf32, #tpu.memory_space<vmem>>, vector<40x128xf32>
      %26 = vector.shape_cast %25 : vector<40x128xf32> to vector<5x8x128xf32>
      %cst_14 = arith.constant dense<0.000000e+00> : vector<8x128xf32>
      %27 = vector.multi_reduction <add>, %26, %cst_14 [0] : vector<5x8x128xf32> to vector<8x128xf32>
      %28 = arith.addf %24, %27 : vector<8x128xf32>
      %c160 = arith.constant 160 : index
      %c0_15 = arith.constant 0 : index
      %29 = vector.load %arg2[%c160, %c0_15] : memref<320x128xf32, #tpu.memory_space<vmem>>, vector<40x128xf32>
      %30 = vector.shape_cast %29 : vector<40x128xf32> to vector<5x8x128xf32>
      %cst_16 = arith.constant dense<0.000000e+00> : vector<8x128xf32>
      %31 = vector.multi_reduction <add>, %30, %cst_16 [0] : vector<5x8x128xf32> to vector<8x128xf32>
      %32 = arith.addf %28, %31 : vector<8x128xf32>
      %c200 = arith.constant 200 : index
      %c0_17 = arith.constant 0 : index
      %33 = vector.load %arg2[%c200, %c0_17] : memref<320x128xf32, #tpu.memory_space<vmem>>, vector<40x128xf32>
      %34 = vector.shape_cast %33 : vector<40x128xf32> to vector<5x8x128xf32>
      %cst_18 = arith.constant dense<0.000000e+00> : vector<8x128xf32>
      %35 = vector.multi_reduction <add>, %34, %cst_18 [0] : vector<5x8x128xf32> to vector<8x128xf32>
      %36 = arith.addf %32, %35 : vector<8x128xf32>
      %c240 = arith.constant 240 : index
      %c0_19 = arith.constant 0 : index
      %37 = vector.load %arg2[%c240, %c0_19] : memref<320x128xf32, #tpu.memory_space<vmem>>, vector<40x128xf32>
      %38 = vector.shape_cast %37 : vector<40x128xf32> to vector<5x8x128xf32>
      %cst_20 = arith.constant dense<0.000000e+00> : vector<8x128xf32>
      %39 = vector.multi_reduction <add>, %38, %cst_20 [0] : vector<5x8x128xf32> to vector<8x128xf32>
      %40 = arith.addf %36, %39 : vector<8x128xf32>
      %c280 = arith.constant 280 : index
      %c0_21 = arith.constant 0 : index
      %41 = vector.load %arg2[%c280, %c0_21] : memref<320x128xf32, #tpu.memory_space<vmem>>, vector<40x128xf32>
      %42 = vector.shape_cast %41 : vector<40x128xf32> to vector<5x8x128xf32>
      %cst_22 = arith.constant dense<0.000000e+00> : vector<8x128xf32>
      %43 = vector.multi_reduction <add>, %42, %cst_22 [0] : vector<5x8x128xf32> to vector<8x128xf32>
      %44 = arith.addf %40, %43 : vector<8x128xf32>
      %c0_23 = arith.constant 0 : index
      %c0_24 = arith.constant 0 : index
      %45 = vector.load %arg4[%c0_23, %c0_24] : memref<8x128xf32, #tpu.memory_space<vmem>>, vector<8x128xf32>
      %46 = arith.addf %45, %44 : vector<8x128xf32>
      %c0_25 = arith.constant 0 : index
      %c0_26 = arith.constant 0 : index
      %47 = vector.load %arg4[%c0_25, %c0_26] : memref<8x128xf32, #tpu.memory_space<vmem>>, vector<8x128xf32>
      tpu.vector_store %arg4[%c0_25, %c0_26], %46 {strides = array<i32>} : memref<8x128xf32, #tpu.memory_space<vmem>>, vector<8x128xf32>,
    } else {
    }
    %c0_i32_3 = arith.constant 0 : i32
    %6 = arith.cmpi eq, %arg1, %c0_i32_3 : i32
    %7 = arith.extui %6 : i1 to i32
    %c0_i32_4 = arith.constant 0 : i32
    %8 = arith.cmpi ne, %7, %c0_i32_4 : i32
    scf.if %8 {
      %12 = tpu.iota {dimensions = array<i32: 0>} : vector<40x128xi32>
      %c320_i32 = arith.constant 320 : i32
      %13 = arith.muli %arg1, %c320_i32 : i32
      %cst = arith.constant 0.000000e+00 : f32
      %14 = vector.broadcast %cst : f32 to vector<8x128xf32>
      %c0 = arith.constant 0 : index
      %c0_7 = arith.constant 0 : index
      %15 = vector.load %arg2[%c0, %c0_7] : memref<320x128xf32, #tpu.memory_space<vmem>>, vector<40x128xf32>
      %c0_i32_8 = arith.constant 0 : i32
      %16 = vector.broadcast %c0_i32_8 : i32 to vector<40x128xi32>
      %17 = arith.addi %16, %12 : vector<40x128xi32>
      %18 = vector.broadcast %13 : i32 to vector<40x128xi32>
      %19 = arith.addi %18, %17 : vector<40x128xi32>
      %c300_i32 = arith.constant 300 : i32
      %20 = vector.broadcast %c300_i32 : i32 to vector<40x128xi32>
      %21 = arith.cmpi slt, %19, %20 : vector<40x128xi32>
      %cst_9 = arith.constant 0.000000e+00 : f32
      %22 = vector.broadcast %cst_9 : f32 to vector<40x128xf32>
      %23 = arith.select %21, %15, %22 : vector<40x128xi1>, vector<40x128xf32>
      %24 = vector.shape_cast %23 : vector<40x128xf32> to vector<5x8x128xf32>
      %cst_10 = arith.constant dense<0.000000e+00> : vector<8x128xf32>
      %25 = vector.multi_reduction <add>, %24, %cst_10 [0] : vector<5x8x128xf32> to vector<8x128xf32>
      %26 = arith.addf %14, %25 : vector<8x128xf32>
      %c40 = arith.constant 40 : index
      %c0_11 = arith.constant 0 : index
      %27 = vector.load %arg2[%c40, %c0_11] : memref<320x128xf32, #tpu.memory_space<vmem>>, vector<40x128xf32>
      %c40_i32 = arith.constant 40 : i32
      %28 = vector.broadcast %c40_i32 : i32 to vector<40x128xi32>
      %29 = arith.addi %28, %12 : vector<40x128xi32>
      %30 = vector.broadcast %13 : i32 to vector<40x128xi32>
      %31 = arith.addi %30, %29 : vector<40x128xi32>
      %c300_i32_12 = arith.constant 300 : i32
      %32 = vector.broadcast %c300_i32_12 : i32 to vector<40x128xi32>
      %33 = arith.cmpi slt, %31, %32 : vector<40x128xi32>
      %cst_13 = arith.constant 0.000000e+00 : f32
      %34 = vector.broadcast %cst_13 : f32 to vector<40x128xf32>
      %35 = arith.select %33, %27, %34 : vector<40x128xi1>, vector<40x128xf32>
      %36 = vector.shape_cast %35 : vector<40x128xf32> to vector<5x8x128xf32>
      %cst_14 = arith.constant dense<0.000000e+00> : vector<8x128xf32>
      %37 = vector.multi_reduction <add>, %36, %cst_14 [0] : vector<5x8x128xf32> to vector<8x128xf32>
      %38 = arith.addf %26, %37 : vector<8x128xf32>
      %c80 = arith.constant 80 : index
      %c0_15 = arith.constant 0 : index
      %39 = vector.load %arg2[%c80, %c0_15] : memref<320x128xf32, #tpu.memory_space<vmem>>, vector<40x128xf32>
      %c80_i32 = arith.constant 80 : i32
      %40 = vector.broadcast %c80_i32 : i32 to vector<40x128xi32>
      %41 = arith.addi %40, %12 : vector<40x128xi32>
      %42 = vector.broadcast %13 : i32 to vector<40x128xi32>
      %43 = arith.addi %42, %41 : vector<40x128xi32>
      %c300_i32_16 = arith.constant 300 : i32
      %44 = vector.broadcast %c300_i32_16 : i32 to vector<40x128xi32>
      %45 = arith.cmpi slt, %43, %44 : vector<40x128xi32>
      %cst_17 = arith.constant 0.000000e+00 : f32
      %46 = vector.broadcast %cst_17 : f32 to vector<40x128xf32>
      %47 = arith.select %45, %39, %46 : vector<40x128xi1>, vector<40x128xf32>
      %48 = vector.shape_cast %47 : vector<40x128xf32> to vector<5x8x128xf32>
      %cst_18 = arith.constant dense<0.000000e+00> : vector<8x128xf32>
      %49 = vector.multi_reduction <add>, %48, %cst_18 [0] : vector<5x8x128xf32> to vector<8x128xf32>
      %50 = arith.addf %38, %49 : vector<8x128xf32>
      %c120 = arith.constant 120 : index
      %c0_19 = arith.constant 0 : index
      %51 = vector.load %arg2[%c120, %c0_19] : memref<320x128xf32, #tpu.memory_space<vmem>>, vector<40x128xf32>
      %c120_i32 = arith.constant 120 : i32
      %52 = vector.broadcast %c120_i32 : i32 to vector<40x128xi32>
      %53 = arith.addi %52, %12 : vector<40x128xi32>
      %54 = vector.broadcast %13 : i32 to vector<40x128xi32>
      %55 = arith.addi %54, %53 : vector<40x128xi32>
      %c300_i32_20 = arith.constant 300 : i32
      %56 = vector.broadcast %c300_i32_20 : i32 to vector<40x128xi32>
      %57 = arith.cmpi slt, %55, %56 : vector<40x128xi32>
      %cst_21 = arith.constant 0.000000e+00 : f32
      %58 = vector.broadcast %cst_21 : f32 to vector<40x128xf32>
      %59 = arith.select %57, %51, %58 : vector<40x128xi1>, vector<40x128xf32>
      %60 = vector.shape_cast %59 : vector<40x128xf32> to vector<5x8x128xf32>
      %cst_22 = arith.constant dense<0.000000e+00> : vector<8x128xf32>
      %61 = vector.multi_reduction <add>, %60, %cst_22 [0] : vector<5x8x128xf32> to vector<8x128xf32>
      %62 = arith.addf %50, %61 : vector<8x128xf32>
      %c160 = arith.constant 160 : index
      %c0_23 = arith.constant 0 : index
      %63 = vector.load %arg2[%c160, %c0_23] : memref<320x128xf32, #tpu.memory_space<vmem>>, vector<40x128xf32>
      %c160_i32 = arith.constant 160 : i32
      %64 = vector.broadcast %c160_i32 : i32 to vector<40x128xi32>
      %65 = arith.addi %64, %12 : vector<40x128xi32>
      %66 = vector.broadcast %13 : i32 to vector<40x128xi32>
      %67 = arith.addi %66, %65 : vector<40x128xi32>
      %c300_i32_24 = arith.constant 300 : i32
      %68 = vector.broadcast %c300_i32_24 : i32 to vector<40x128xi32>
      %69 = arith.cmpi slt, %67, %68 : vector<40x128xi32>
      %cst_25 = arith.constant 0.000000e+00 : f32
      %70 = vector.broadcast %cst_25 : f32 to vector<40x128xf32>
      %71 = arith.select %69, %63, %70 : vector<40x128xi1>, vector<40x128xf32>
      %72 = vector.shape_cast %71 : vector<40x128xf32> to vector<5x8x128xf32>
      %cst_26 = arith.constant dense<0.000000e+00> : vector<8x128xf32>
      %73 = vector.multi_reduction <add>, %72, %cst_26 [0] : vector<5x8x128xf32> to vector<8x128xf32>
      %74 = arith.addf %62, %73 : vector<8x128xf32>
      %c200 = arith.constant 200 : index
      %c0_27 = arith.constant 0 : index
      %75 = vector.load %arg2[%c200, %c0_27] : memref<320x128xf32, #tpu.memory_space<vmem>>, vector<40x128xf32>
      %c200_i32 = arith.constant 200 : i32
      %76 = vector.broadcast %c200_i32 : i32 to vector<40x128xi32>
      %77 = arith.addi %76, %12 : vector<40x128xi32>
      %78 = vector.broadcast %13 : i32 to vector<40x128xi32>
      %79 = arith.addi %78, %77 : vector<40x128xi32>
      %c300_i32_28 = arith.constant 300 : i32
      %80 = vector.broadcast %c300_i32_28 : i32 to vector<40x128xi32>
      %81 = arith.cmpi slt, %79, %80 : vector<40x128xi32>
      %cst_29 = arith.constant 0.000000e+00 : f32
      %82 = vector.broadcast %cst_29 : f32 to vector<40x128xf32>
      %83 = arith.select %81, %75, %82 : vector<40x128xi1>, vector<40x128xf32>
      %84 = vector.shape_cast %83 : vector<40x128xf32> to vector<5x8x128xf32>
      %cst_30 = arith.constant dense<0.000000e+00> : vector<8x128xf32>
      %85 = vector.multi_reduction <add>, %84, %cst_30 [0] : vector<5x8x128xf32> to vector<8x128xf32>
      %86 = arith.addf %74, %85 : vector<8x128xf32>
      %c240 = arith.constant 240 : index
      %c0_31 = arith.constant 0 : index
      %87 = vector.load %arg2[%c240, %c0_31] : memref<320x128xf32, #tpu.memory_space<vmem>>, vector<40x128xf32>
      %c240_i32 = arith.constant 240 : i32
      %88 = vector.broadcast %c240_i32 : i32 to vector<40x128xi32>
      %89 = arith.addi %88, %12 : vector<40x128xi32>
      %90 = vector.broadcast %13 : i32 to vector<40x128xi32>
      %91 = arith.addi %90, %89 : vector<40x128xi32>
      %c300_i32_32 = arith.constant 300 : i32
      %92 = vector.broadcast %c300_i32_32 : i32 to vector<40x128xi32>
      %93 = arith.cmpi slt, %91, %92 : vector<40x128xi32>
      %cst_33 = arith.constant 0.000000e+00 : f32
      %94 = vector.broadcast %cst_33 : f32 to vector<40x128xf32>
      %95 = arith.select %93, %87, %94 : vector<40x128xi1>, vector<40x128xf32>
      %96 = vector.shape_cast %95 : vector<40x128xf32> to vector<5x8x128xf32>
      %cst_34 = arith.constant dense<0.000000e+00> : vector<8x128xf32>
      %97 = vector.multi_reduction <add>, %96, %cst_34 [0] : vector<5x8x128xf32> to vector<8x128xf32>
      %98 = arith.addf %86, %97 : vector<8x128xf32>
      %c280 = arith.constant 280 : index
      %c0_35 = arith.constant 0 : index
      %99 = vector.load %arg2[%c280, %c0_35] : memref<320x128xf32, #tpu.memory_space<vmem>>, vector<40x128xf32>
      %c280_i32 = arith.constant 280 : i32
      %100 = vector.broadcast %c280_i32 : i32 to vector<40x128xi32>
      %101 = arith.addi %100, %12 : vector<40x128xi32>
      %102 = vector.broadcast %13 : i32 to vector<40x128xi32>
      %103 = arith.addi %102, %101 : vector<40x128xi32>
      %c300_i32_36 = arith.constant 300 : i32
      %104 = vector.broadcast %c300_i32_36 : i32 to vector<40x128xi32>
      %105 = arith.cmpi slt, %103, %104 : vector<40x128xi32>
      %cst_37 = arith.constant 0.000000e+00 : f32
      %106 = vector.broadcast %cst_37 : f32 to vector<40x128xf32>
      %107 = arith.select %105, %99, %106 : vector<40x128xi1>, vector<40x128xf32>
      %108 = vector.shape_cast %107 : vector<40x128xf32> to vector<5x8x128xf32>
      %cst_38 = arith.constant dense<0.000000e+00> : vector<8x128xf32>
      %109 = vector.multi_reduction <add>, %108, %cst_38 [0] : vector<5x8x128xf32> to vector<8x128xf32>
      %110 = arith.addf %98, %109 : vector<8x128xf32>
      %c0_39 = arith.constant 0 : index
      %c0_40 = arith.constant 0 : index
      %111 = vector.load %arg4[%c0_39, %c0_40] : memref<8x128xf32, #tpu.memory_space<vmem>>, vector<8x128xf32>
      %112 = arith.addf %111, %110 : vector<8x128xf32>
      %c0_41 = arith.constant 0 : index
      %c0_42 = arith.constant 0 : index
      %113 = vector.load %arg4[%c0_41, %c0_42] : memref<8x128xf32, #tpu.memory_space<vmem>>, vector<8x128xf32>
      tpu.vector_store %arg4[%c0_41, %c0_42], %112 {strides = array<i32>} : memref<8x128xf32, #tpu.memory_space<vmem>>, vector<8x128xf32>,
    } else {
    }
    %c0_i32_5 = arith.constant 0 : i32
    %9 = arith.cmpi eq, %arg1, %c0_i32_5 : i32
    %10 = arith.extui %9 : i1 to i32
    %c0_i32_6 = arith.constant 0 : i32
    %11 = arith.cmpi ne, %10, %c0_i32_6 : i32
    scf.if %11 {
      %c0 = arith.constant 0 : index
      %c0_7 = arith.constant 0 : index
      %12 = vector.load %arg4[%c0, %c0_7] : memref<8x128xf32, #tpu.memory_space<vmem>>, vector<8x128xf32>
      %cst = arith.constant dense<0.000000e+00> : vector<128xf32>
      %13 = vector.multi_reduction <add>, %12, %cst [0] : vector<8x128xf32> to vector<128xf32>
      %14 = vector.shape_cast %13 : vector<128xf32> to vector<1x128xf32>
      %cst_8 = arith.constant 0.00333333341 : f32
      %15 = vector.broadcast %cst_8 : f32 to vector<1x128xf32>
      %16 = arith.mulf %14, %15 : vector<1x128xf32>
      %17 = arith.negf %16 : vector<1x128xf32>
      %18 = math.exp %17 : vector<1x128xf32>
      %cst_9 = arith.constant 1.000000e+00 : f32
      %19 = vector.broadcast %cst_9 : f32 to vector<1x128xf32>
      %20 = arith.addf %19, %18 : vector<1x128xf32>
      %21 = arith.divf %19, %20 : vector<1x128xf32>
      %c0_10 = arith.constant 0 : index
      %c0_11 = arith.constant 0 : index
      %22 = vector.load %arg3[%c0_10, %c0_11] : memref<1x128xf32, #tpu.memory_space<vmem>>, vector<1x128xf32>
      tpu.vector_store %arg3[%c0_10, %c0_11], %21 {strides = array<i32>} : memref<1x128xf32, #tpu.memory_space<vmem>>, vector<1x128xf32>,
    } else {
    }
    return
  }
  func.func @transform_0(%arg0: i32, %arg1: i32) -> (i32, i32) {
    %c0_i32 = arith.constant 0 : i32
    return %arg1, %arg0 : i32, i32
  }
  func.func @transform_1(%arg0: i32, %arg1: i32) -> (i32, i32) {
    %c0_i32 = arith.constant 0 : i32
    %c0_i32_0 = arith.constant 0 : i32
    return %c0_i32, %arg0 : i32, i32
  }
}

</mosaic_0001>

<llo_original>
// kernel: tpu_custom_call.1
$region0: #{tpu_custom_call.1}
  #allocation0 [shape = 'u32[]', space=smem, size = 0x4, offset = 0x4, fixed_abs, tag = 'smem constant byte address 0x4 - core index']
  #allocation1 [shape = 'u32[144,128]{1,0:T(1,128)}', space=vmem, size = 0x12000, scoped, tag = 'internal scratch']
  #allocation2 [shape = 'f32[8,128]{1,0:T(8,128)}', space=vmem, size = 0x1000, scoped, tag = 'scratch operand']
  %s0 = inlined_call_operand.vmem [shape: f32[300,200], index: 0, kind: input, shape index: {}]
  %s1 = inlined_call_operand.hbm [shape: f32[1,200], index: 1, kind: output, shape index: {}]
  %s2 = sld [smem:[#allocation0]]
  $region101: #{tpu_custom_call.1} parent=0
    _
  %s4 = ssub.s32 1, %s2
  %s5 = scalar_select 0, %s4, %s2
  $region1: #{tpu_custom_call.1} parent=0
    #allocation3 [shape = 'u8[327680]{0}', space=vmem, size = 0x50000, scoped, tag = 'input window, operand 0']
    #allocation4 [shape = 'u8[1024]{0}', space=vmem, size = 0x400, scoped, tag = 'output window, operand 0']
    #allocation5 [shape = 's32[2]{0}', space=sflag, size = 0x8, scoped, tag = 'scoped memory for tpu_custom_call.1']
    %6 = vsyncpa [#allocation5], 0
    %s7 = scalar_lea.sflag [#allocation5], 1
    %8 = vsyncpa %s7, 0
    loop: start=0, step=1, limit=4
    $region2: #{tpu_custom_call.1} parent=1 // loop_pre_header
      _
    $region3: #{tpu_custom_call.1} parent=1 // loop_header
      %s10 = sphi 0, %s14
      %p11 = scmp.ge.s32.totalorder %s10, 4
      %s17 = sphi 0, %s29
      %s18 = sphi 0, %s25
      %s19 = sphi 0, %s17
      %s20 = sphi 0, %s18
      %s21 = sphi 0, %s19
      %s22 = sphi 0, %s20
      %s34 = sphi 0, %s36
      %s37 = sphi 0, %s34
      %s38 = sphi 0, %s37
      %s54 = sphi 0, %s38
      %s60 = sphi 0, %s62
      %s63 = sphi 0, %s60
      %s64 = sphi 0, %s63
      %s80 = sphi 0, %s64
    $region4: #{tpu_custom_call.1} parent=1 // loop_header_branch
      %13 = sbr.rel (%p11) target = $region8
    $region5: #{tpu_custom_call.1} parent=1 // loop_body
      %s15 = ssub.s32 %s10, 1
      %s16 = ssub.s32 %s10, 2
      %s23 = sadd.s32 1, %s18
      %p24 = scmp.ge.s32.totalorder %s23, 1
      %s25 = scalar_select %p24, 0, %s23
      %s26 = sadd.s32 1, %s17
      %s27 = scalar_select %p24, %s26, %s17
      %p28 = scmp.ge.s32.totalorder %s27, 2
      %s29 = scalar_select %p28, 0, %s27
      %s30 = ssub.s32 %s18, %s25
      %s31 = ssub.s32 %s17, %s29
      %s32 = sor.u32 %s30, %s31
      %p33 = scmp.eq.s32.totalorder %s32, 0
      %s35 = sadd.s32 %s34, 1
      %s36 = scalar_select %p33, %s34, %s35
      %p39 = pneg %p33
      %p40 = scmp.eq.s32.totalorder %s10, 1
      %p41 = por %p39, %p40
      %p42 = scmp.ne.s32.totalorder %s34, %s37
      %p43 = scmp.eq.s32.totalorder %s10, 0
      %p44 = por %p42, %p43
      %p45 = scmp.ne.s32.totalorder %s34, %s37
      %p46 = scmp.eq.s32.totalorder %s15, 1
      %p47 = por %p45, %p46
      %p48 = scmp.ne.s32.totalorder %s37, %s38
      %p49 = scmp.eq.s32.totalorder %s15, 0
      %p50 = por %p48, %p49
      %p51 = scmp.ne.s32.totalorder %s37, %s38
      %p52 = scmp.eq.s32.totalorder %s16, 1
      %p53 = por %p51, %p52
      %p55 = scmp.ne.s32.totalorder %s38, %s54
      %p56 = scmp.eq.s32.totalorder %s16, 0
      %p57 = por %p55, %p56
      %s58 = ssub.s32 %s17, %s29
      %p59 = scmp.eq.s32.totalorder %s58, 0
      %s61 = sadd.s32 %s60, 1
      %s62 = scalar_select %p59, %s60, %s61
      %p65 = pneg %p59
      %p66 = scmp.eq.s32.totalorder %s10, 1
      %p67 = por %p65, %p66
      %p68 = scmp.ne.s32.totalorder %s60, %s63
      %p69 = scmp.eq.s32.totalorder %s10, 0
      %p70 = por %p68, %p69
      %p71 = scmp.ne.s32.totalorder %s60, %s63
      %p72 = scmp.eq.s32.totalorder %s15, 1
      %p73 = por %p71, %p72
      %p74 = scmp.ne.s32.totalorder %s63, %s64
      %p75 = scmp.eq.s32.totalorder %s15, 0
      %p76 = por %p74, %p75
      %p77 = scmp.ne.s32.totalorder %s63, %s64
      %p78 = scmp.eq.s32.totalorder %s16, 1
      %p79 = por %p77, %p78
      %p81 = scmp.ne.s32.totalorder %s64, %s80
      %p82 = scmp.eq.s32.totalorder %s16, 0
      %p83 = por %p81, %p82
      %p84 = scmp.le.s32.totalorder 1, %s10
      %p85 = scmp.lt.s32.totalorder %s10, 3
      %p86 = pnand %p84, %p85
      %p87 = pneg %p86
      // Predicated region
      $region9: #{tpu_custom_call.1} parent=5 // pred_check
        _
      $region10: #{tpu_custom_call.1} parent=5 // pred_check_branch
        %89 = sbr.rel (%p86) target = $region12
      $region11: #{tpu_custom_call.1} parent=5 // pred_region
        %s90 = ssub.s32 %s10, 1
      $region12: #{tpu_custom_call.1} parent=5 // pred_fallthru
        _
      %p91 = scmp.lt.s32.totalorder %s10, 2
      // Predicated region
      $region13: #{tpu_custom_call.1} parent=5 // pred_check
        %p92 = pneg %p91
      $region14: #{tpu_custom_call.1} parent=5 // pred_check_branch
        %94 = sbr.rel (%p92) target = $region16
      $region15: #{tpu_custom_call.1} parent=5 // pred_region
        // Predicated region
        $region17: #{tpu_custom_call.1} parent=15 // pred_check
          %p95 = pneg %p44
        $region18: #{tpu_custom_call.1} parent=15 // pred_check_branch
          %97 = sbr.rel (%p95) target = $region20
        $region19: #{tpu_custom_call.1} parent=15 // pred_region
          %s98 = sand.u32 %s34, 1
          %s99 = sand.u32 %s34, 1
          %s100 = smul.addr %s99, 320
          %s101 = scalar_lea.vmem [#allocation3], %s100
          %s102 = smul.u32 40, %s18
          %s103 = ssub.s32 38, %s102
          %s104 = smul.u32 128, %s103
          %p105 = scmp.ne.s32.totalorder 0, %s104
          %s106 = smul.addr %s102, 2
          %s107 = sadd.s32 %s17, %s106
          %s108 = smul.addr %s107, 8
          %s109 = scalar_lea.vmem %s0, %s108
          // Predicated region
          $region21: #{tpu_custom_call.1} parent=19 // pred_check
            %p110 = pneg %p105
          $region22: #{tpu_custom_call.1} parent=19 // pred_check_branch
            %112 = sbr.rel (%p110) target = $region24
          $region23: #{tpu_custom_call.1} parent=19 // pred_region
            // Predicated region
            $region25: #{tpu_custom_call.1} parent=23 // pred_check
              _
            $region26: #{tpu_custom_call.1} parent=23 // pred_check_branch
              %114 = sbr.rel (0) target = $region28
            $region27: #{tpu_custom_call.1} parent=23 // pred_region
              // Predicated region
              $region47: #{tpu_custom_call.1} parent=27 // pred_check
                _
              $region48: #{tpu_custom_call.1} parent=27 // pred_check_branch
                %238 = sbr.rel (0) target = $region50
              $region49: #{tpu_custom_call.1} parent=27 // pred_region
                %s239 = sdiv.u32.pop %s103, 38
                %s240 = srem.u32.pop %s103, 38
                // While loop
                $region51: #{tpu_custom_call.1} parent=49 // loop_pre_header
                  _
                $region52: #{tpu_custom_call.1} parent=49 // loop_header
                  %s242 = sphi 0, %s244
                  %p243 = scmp.ge.s32.totalorder %s242, %s239
                  %s247 = sphi 0, %s328
                  %s248 = sphi %s109, %s331
                  %s249 = sphi %s101, %s332
                $region53: #{tpu_custom_call.1} parent=49 // loop_header_branch
                  %246 = sbr.rel (%p243) target = $region57
                $region54: #{tpu_custom_call.1} parent=49 // loop_body
                  %v250 = vld [vmem:[%s248] sm:$0xff]
                  %251 = vst [vmem:[%s249] sm:$0xff] %v250
                  %v252 = vld [vmem:[%s248 + $0x10] sm:$0xff]
                  %253 = vst [vmem:[%s249 + $0x8] sm:$0xff] %v252
                  %v254 = vld [vmem:[%s248 + $0x20] sm:$0xff]
                  %255 = vst [vmem:[%s249 + $0x10] sm:$0xff] %v254
                  %v256 = vld [vmem:[%s248 + $0x30] sm:$0xff]
                  %257 = vst [vmem:[%s249 + $0x18] sm:$0xff] %v256
                  %v258 = vld [vmem:[%s248 + $0x40] sm:$0xff]
                  %259 = vst [vmem:[%s249 + $0x20] sm:$0xff] %v258
                  %v260 = vld [vmem:[%s248 + $0x50] sm:$0xff]
                  %261 = vst [vmem:[%s249 + $0x28] sm:$0xff] %v260
                  %v262 = vld [vmem:[%s248 + $0x60] sm:$0xff]
                  %263 = vst [vmem:[%s249 + $0x30] sm:$0xff] %v262
                  %v264 = vld [vmem:[%s248 + $0x70] sm:$0xff]
                  %265 = vst [vmem:[%s249 + $0x38] sm:$0xff] %v264
                  %v266 = vld [vmem:[%s248 + $0x80] sm:$0xff]
                  %267 = vst [vmem:[%s249 + $0x40] sm:$0xff] %v266
                  %v268 = vld [vmem:[%s248 + $0x90] sm:$0xff]
                  %269 = vst [vmem:[%s249 + $0x48] sm:$0xff] %v268
                  %v270 = vld [vmem:[%s248 + $0xa0] sm:$0xff]
                  %271 = vst [vmem:[%s249 + $0x50] sm:$0xff] %v270
                  %v272 = vld [vmem:[%s248 + $0xb0] sm:$0xff]
                  %273 = vst [vmem:[%s249 + $0x58] sm:$0xff] %v272
                  %v274 = vld [vmem:[%s248 + $0xc0] sm:$0xff]
                  %275 = vst [vmem:[%s249 + $0x60] sm:$0xff] %v274
                  %v276 = vld [vmem:[%s248 + $0xd0] sm:$0xff]
                  %277 = vst [vmem:[%s249 + $0x68] sm:$0xff] %v276
                  %v278 = vld [vmem:[%s248 + $0xe0] sm:$0xff]
                  %279 = vst [vmem:[%s249 + $0x70] sm:$0xff] %v278
                  %v280 = vld [vmem:[%s248 + $0xf0] sm:$0xff]
                  %281 = vst [vmem:[%s249 + $0x78] sm:$0xff] %v280
                  %v282 = vld [vmem:[%s248 + $0x100] sm:$0xff]
                  %283 = vst [vmem:[%s249 + $0x80] sm:$0xff] %v282
                  %v284 = vld [vmem:[%s248 + $0x110] sm:$0xff]
                  %285 = vst [vmem:[%s249 + $0x88] sm:$0xff] %v284
                  %v286 = vld [vmem:[%s248 + $0x120] sm:$0xff]
                  %287 = vst [vmem:[%s249 + $0x90] sm:$0xff] %v286
                  %v288 = vld [vmem:[%s248 + $0x130] sm:$0xff]
                  %289 = vst [vmem:[%s249 + $0x98] sm:$0xff] %v288
                  %v290 = vld [vmem:[%s248 + $0x140] sm:$0xff]
                  %291 = vst [vmem:[%s249 + $0xa0] sm:$0xff] %v290
                  %v292 = vld [vmem:[%s248 + $0x150] sm:$0xff]
                  %293 = vst [vmem:[%s249 + $0xa8] sm:$0xff] %v292
                  %v294 = vld [vmem:[%s248 + $0x160] sm:$0xff]
                  %295 = vst [vmem:[%s249 + $0xb0] sm:$0xff] %v294
                  %v296 = vld [vmem:[%s248 + $0x170] sm:$0xff]
                  %297 = vst [vmem:[%s249 + $0xb8] sm:$0xff] %v296
                  %v298 = vld [vmem:[%s248 + $0x180] sm:$0xff]
                  %299 = vst [vmem:[%s249 + $0xc0] sm:$0xff] %v298
                  %v300 = vld [vmem:[%s248 + $0x190] sm:$0xff]
                  %301 = vst [vmem:[%s249 + $0xc8] sm:$0xff] %v300
                  %v302 = vld [vmem:[%s248 + $0x1a0] sm:$0xff]
                  %303 = vst [vmem:[%s249 + $0xd0] sm:$0xff] %v302
                  %v304 = vld [vmem:[%s248 + $0x1b0] sm:$0xff]
                  %305 = vst [vmem:[%s249 + $0xd8] sm:$0xff] %v304
                  %v306 = vld [vmem:[%s248 + $0x1c0] sm:$0xff]
                  %307 = vst [vmem:[%s249 + $0xe0] sm:$0xff] %v306
                  %v308 = vld [vmem:[%s248 + $0x1d0] sm:$0xff]
                  %309 = vst [vmem:[%s249 + $0xe8] sm:$0xff] %v308
                  %v310 = vld [vmem:[%s248 + $0x1e0] sm:$0xff]
                  %311 = vst [vmem:[%s249 + $0xf0] sm:$0xff] %v310
                  %v312 = vld [vmem:[%s248 + $0x1f0] sm:$0xff]
                  %313 = vst [vmem:[%s249 + $0xf8] sm:$0xff] %v312
                  %v314 = vld [vmem:[%s248 + $0x200] sm:$0xff]
                  %315 = vst [vmem:[%s249 + $0x100] sm:$0xff] %v314
                  %v316 = vld [vmem:[%s248 + $0x210] sm:$0xff]
                  %317 = vst [vmem:[%s249 + $0x108] sm:$0xff] %v316
                  %v318 = vld [vmem:[%s248 + $0x220] sm:$0xff]
                  %319 = vst [vmem:[%s249 + $0x110] sm:$0xff] %v318
                  %v320 = vld [vmem:[%s248 + $0x230] sm:$0xff]
                  %321 = vst [vmem:[%s249 + $0x118] sm:$0xff] %v320
                  %v322 = vld [vmem:[%s248 + $0x240] sm:$0xff]
                  %323 = vst [vmem:[%s249 + $0x120] sm:$0xff] %v322
                  %v324 = vld [vmem:[%s248 + $0x250] sm:$0xff]
                  %325 = vst [vmem:[%s249 + $0x128] sm:$0xff] %v324
                  %s326 = sadd.s32 1, %s247
                  %p327 = scmp.ge.s32.totalorder %s326, %s239
                  %s328 = scalar_select %p327, 0, %s326
                  %s329 = smul.u32 %s328, 608
                  %s330 = smul.u32 %s328, 304
                  %s331 = scalar_lea.vmem %s109, %s329
                  %s332 = scalar_lea.vmem %s101, %s330 [#allocation3]
                $region55: #{tpu_custom_call.1} parent=49 // loop_footer
                  %s244 = sadd.s32 %s242, 1
                $region56: #{tpu_custom_call.1} parent=49 // loop_footer_branch
                  %241 = sbr.rel target = $region52
                $region57: #{tpu_custom_call.1} parent=49 // loop_exit
                  _
                %s333 = sdiv.u32.pop %s103, 38
                %s334 = srem.u32.pop %s103, 38
                %s335 = smul.u32 %s333, 38
                %s336 = smul.u32 16, %s335
                %s337 = scalar_lea.vmem %s109, %s336
                %s338 = smul.u32 8, %s335
                %s339 = scalar_lea.vmem %s101, %s338 [#allocation3]
                // While loop
                $region58: #{tpu_custom_call.1} parent=49 // loop_pre_header
                  _
                $region59: #{tpu_custom_call.1} parent=49 // loop_header
                  %s341 = sphi 0, %s343
                  %p342 = scmp.ge.s32.totalorder %s341, %s334
                  %s346 = sphi 0, %s353
                  %s347 = sphi %s337, %s356
                  %s348 = sphi %s339, %s357
                $region60: #{tpu_custom_call.1} parent=49 // loop_header_branch
                  %345 = sbr.rel (%p342) target = $region64
                $region61: #{tpu_custom_call.1} parent=49 // loop_body
                  %v349 = vld [vmem:[%s347] sm:$0xff]
                  %350 = vst [vmem:[%s348] sm:$0xff] %v349
                  %s351 = sadd.s32 1, %s346
                  %p352 = scmp.ge.s32.totalorder %s351, %s334
                  %s353 = scalar_select %p352, 0, %s351
                  %s354 = smul.u32 %s353, 16
                  %s355 = smul.u32 %s353, 8
                  %s356 = scalar_lea.vmem %s337, %s354
                  %s357 = scalar_lea.vmem %s339, %s355 [#allocation3]
                $region62: #{tpu_custom_call.1} parent=49 // loop_footer
                  %s343 = sadd.s32 %s341, 1
                $region63: #{tpu_custom_call.1} parent=49 // loop_footer_branch
                  %340 = sbr.rel target = $region59
                $region64: #{tpu_custom_call.1} parent=49 // loop_exit
                  _
              $region50: #{tpu_custom_call.1} parent=27 // pred_fallthru
                _
              // Predicated region
              $region65: #{tpu_custom_call.1} parent=27 // pred_check
                _
              $region66: #{tpu_custom_call.1} parent=27 // pred_check_branch
                %359 = sbr.rel target = $region68
              $region67: #{tpu_custom_call.1} parent=27 // pred_region
                _
              $region68: #{tpu_custom_call.1} parent=27 // pred_fallthru
                _
            $region28: #{tpu_custom_call.1} parent=23 // pred_fallthru
              _
            // Predicated region
            $region29: #{tpu_custom_call.1} parent=23 // pred_check
              _
            $region30: #{tpu_custom_call.1} parent=23 // pred_check_branch
              %116 = sbr.rel target = $region32
            $region31: #{tpu_custom_call.1} parent=23 // pred_region
              %s118 = sdiv.u32.pop %s103, 38
              %s119 = srem.u32.pop %s103, 38
              // While loop
              $region33: #{tpu_custom_call.1} parent=31 // loop_pre_header
                _
              $region34: #{tpu_custom_call.1} parent=31 // loop_header
                %s121 = sphi 0, %s123
                %p122 = scmp.ge.s32.totalorder %s121, %s118
                %s126 = sphi 0, %s207
                %s127 = sphi %s109, %s210
                %s128 = sphi %s101, %s211
              $region35: #{tpu_custom_call.1} parent=31 // loop_header_branch
                %125 = sbr.rel (%p122) target = $region39
              $region36: #{tpu_custom_call.1} parent=31 // loop_body
                %v129 = vld [vmem:[%s127] sm:$0xff]
                %130 = vst [vmem:[%s128] sm:$0xff] %v129
                %v131 = vld [vmem:[%s127 + $0x10] sm:$0xff]
                %132 = vst [vmem:[%s128 + $0x8] sm:$0xff] %v131
                %v133 = vld [vmem:[%s127 + $0x20] sm:$0xff]
                %134 = vst [vmem:[%s128 + $0x10] sm:$0xff] %v133
                %v135 = vld [vmem:[%s127 + $0x30] sm:$0xff]
                %136 = vst [vmem:[%s128 + $0x18] sm:$0xff] %v135
                %v137 = vld [vmem:[%s127 + $0x40] sm:$0xff]
                %138 = vst [vmem:[%s128 + $0x20] sm:$0xff] %v137
                %v139 = vld [vmem:[%s127 + $0x50] sm:$0xff]
                %140 = vst [vmem:[%s128 + $0x28] sm:$0xff] %v139
                %v141 = vld [vmem:[%s127 + $0x60] sm:$0xff]
                %142 = vst [vmem:[%s128 + $0x30] sm:$0xff] %v141
                %v143 = vld [vmem:[%s127 + $0x70] sm:$0xff]
                %144 = vst [vmem:[%s128 + $0x38] sm:$0xff] %v143
                %v145 = vld [vmem:[%s127 + $0x80] sm:$0xff]
                %146 = vst [vmem:[%s128 + $0x40] sm:$0xff] %v145
                %v147 = vld [vmem:[%s127 + $0x90] sm:$0xff]
                %148 = vst [vmem:[%s128 + $0x48] sm:$0xff] %v147
                %v149 = vld [vmem:[%s127 + $0xa0] sm:$0xff]
                %150 = vst [vmem:[%s128 + $0x50] sm:$0xff] %v149
                %v151 = vld [vmem:[%s127 + $0xb0] sm:$0xff]
                %152 = vst [vmem:[%s128 + $0x58] sm:$0xff] %v151
                %v153 = vld [vmem:[%s127 + $0xc0] sm:$0xff]
                %154 = vst [vmem:[%s128 + $0x60] sm:$0xff] %v153
                %v155 = vld [vmem:[%s127 + $0xd0] sm:$0xff]
                %156 = vst [vmem:[%s128 + $0x68] sm:$0xff] %v155
                %v157 = vld [vmem:[%s127 + $0xe0] sm:$0xff]
                %158 = vst [vmem:[%s128 + $0x70] sm:$0xff] %v157
                %v159 = vld [vmem:[%s127 + $0xf0] sm:$0xff]
                %160 = vst [vmem:[%s128 + $0x78] sm:$0xff] %v159
                %v161 = vld [vmem:[%s127 + $0x100] sm:$0xff]
                %162 = vst [vmem:[%s128 + $0x80] sm:$0xff] %v161
                %v163 = vld [vmem:[%s127 + $0x110] sm:$0xff]
                %164 = vst [vmem:[%s128 + $0x88] sm:$0xff] %v163
                %v165 = vld [vmem:[%s127 + $0x120] sm:$0xff]
                %166 = vst [vmem:[%s128 + $0x90] sm:$0xff] %v165
                %v167 = vld [vmem:[%s127 + $0x130] sm:$0xff]
                %168 = vst [vmem:[%s128 + $0x98] sm:$0xff] %v167
                %v169 = vld [vmem:[%s127 + $0x140] sm:$0xff]
                %170 = vst [vmem:[%s128 + $0xa0] sm:$0xff] %v169
                %v171 = vld [vmem:[%s127 + $0x150] sm:$0xff]
                %172 = vst [vmem:[%s128 + $0xa8] sm:$0xff] %v171
                %v173 = vld [vmem:[%s127 + $0x160] sm:$0xff]
                %174 = vst [vmem:[%s128 + $0xb0] sm:$0xff] %v173
                %v175 = vld [vmem:[%s127 + $0x170] sm:$0xff]
                %176 = vst [vmem:[%s128 + $0xb8] sm:$0xff] %v175
                %v177 = vld [vmem:[%s127 + $0x180] sm:$0xff]
                %178 = vst [vmem:[%s128 + $0xc0] sm:$0xff] %v177
                %v179 = vld [vmem:[%s127 + $0x190] sm:$0xff]
                %180 = vst [vmem:[%s128 + $0xc8] sm:$0xff] %v179
                %v181 = vld [vmem:[%s127 + $0x1a0] sm:$0xff]
                %182 = vst [vmem:[%s128 + $0xd0] sm:$0xff] %v181
                %v183 = vld [vmem:[%s127 + $0x1b0] sm:$0xff]
                %184 = vst [vmem:[%s128 + $0xd8] sm:$0xff] %v183
                %v185 = vld [vmem:[%s127 + $0x1c0] sm:$0xff]
                %186 = vst [vmem:[%s128 + $0xe0] sm:$0xff] %v185
                %v187 = vld [vmem:[%s127 + $0x1d0] sm:$0xff]
                %188 = vst [vmem:[%s128 + $0xe8] sm:$0xff] %v187
                %v189 = vld [vmem:[%s127 + $0x1e0] sm:$0xff]
                %190 = vst [vmem:[%s128 + $0xf0] sm:$0xff] %v189
                %v191 = vld [vmem:[%s127 + $0x1f0] sm:$0xff]
                %192 = vst [vmem:[%s128 + $0xf8] sm:$0xff] %v191
                %v193 = vld [vmem:[%s127 + $0x200] sm:$0xff]
                %194 = vst [vmem:[%s128 + $0x100] sm:$0xff] %v193
                %v195 = vld [vmem:[%s127 + $0x210] sm:$0xff]
                %196 = vst [vmem:[%s128 + $0x108] sm:$0xff] %v195
                %v197 = vld [vmem:[%s127 + $0x220] sm:$0xff]
                %198 = vst [vmem:[%s128 + $0x110] sm:$0xff] %v197
                %v199 = vld [vmem:[%s127 + $0x230] sm:$0xff]
                %200 = vst [vmem:[%s128 + $0x118] sm:$0xff] %v199
                %v201 = vld [vmem:[%s127 + $0x240] sm:$0xff]
                %202 = vst [vmem:[%s128 + $0x120] sm:$0xff] %v201
                %v203 = vld [vmem:[%s127 + $0x250] sm:$0xff]
                %204 = vst [vmem:[%s128 + $0x128] sm:$0xff] %v203
                %s205 = sadd.s32 1, %s126
                %p206 = scmp.ge.s32.totalorder %s205, %s118
                %s207 = scalar_select %p206, 0, %s205
                %s208 = smul.u32 %s207, 608
                %s209 = smul.u32 %s207, 304
                %s210 = scalar_lea.vmem %s109, %s208
                %s211 = scalar_lea.vmem %s101, %s209 [#allocation3]
              $region37: #{tpu_custom_call.1} parent=31 // loop_footer
                %s123 = sadd.s32 %s121, 1
              $region38: #{tpu_custom_call.1} parent=31 // loop_footer_branch
                %120 = sbr.rel target = $region34
              $region39: #{tpu_custom_call.1} parent=31 // loop_exit
                _
              %s212 = sdiv.u32.pop %s103, 38
              %s213 = srem.u32.pop %s103, 38
              %s214 = smul.u32 %s212, 38
              %s215 = smul.u32 16, %s214
              %s216 = scalar_lea.vmem %s109, %s215
              %s217 = smul.u32 8, %s214
              %s218 = scalar_lea.vmem %s101, %s217 [#allocation3]
              // While loop
              $region40: #{tpu_custom_call.1} parent=31 // loop_pre_header
                _
              $region41: #{tpu_custom_call.1} parent=31 // loop_header
                %s220 = sphi 0, %s222
                %p221 = scmp.ge.s32.totalorder %s220, %s213
                %s225 = sphi 0, %s232
                %s226 = sphi %s216, %s235
                %s227 = sphi %s218, %s236
              $region42: #{tpu_custom_call.1} parent=31 // loop_header_branch
                %224 = sbr.rel (%p221) target = $region46
              $region43: #{tpu_custom_call.1} parent=31 // loop_body
                %v228 = vld [vmem:[%s226] sm:$0xff]
                %229 = vst [vmem:[%s227] sm:$0xff] %v228
                %s230 = sadd.s32 1, %s225
                %p231 = scmp.ge.s32.totalorder %s230, %s213
                %s232 = scalar_select %p231, 0, %s230
                %s233 = smul.u32 %s232, 16
                %s234 = smul.u32 %s232, 8
                %s235 = scalar_lea.vmem %s216, %s233
                %s236 = scalar_lea.vmem %s218, %s234 [#allocation3]
              $region44: #{tpu_custom_call.1} parent=31 // loop_footer
                %s222 = sadd.s32 %s220, 1
              $region45: #{tpu_custom_call.1} parent=31 // loop_footer_branch
                %219 = sbr.rel target = $region41
              $region46: #{tpu_custom_call.1} parent=31 // loop_exit
                _
            $region32: #{tpu_custom_call.1} parent=23 // pred_fallthru
              _
          $region24: #{tpu_custom_call.1} parent=19 // pred_fallthru
            _
          %360 = vnop
        $region20: #{tpu_custom_call.1} parent=15 // pred_fallthru
          _
      $region16: #{tpu_custom_call.1} parent=5 // pred_fallthru
        _
      %p361 = scmp.le.s32.totalorder 1, %s10
      %p362 = scmp.lt.s32.totalorder %s10, 3
      %p363 = pnand %p361, %p362
      %p364 = pneg %p363
      // Predicated region
      $region69: #{tpu_custom_call.1} parent=5 // pred_check
        _
      $region70: #{tpu_custom_call.1} parent=5 // pred_check_branch
        %366 = sbr.rel (%p363) target = $region72
      $region71: #{tpu_custom_call.1} parent=5 // pred_region
        %s367 = ssub.s32 %s10, 1
        %s368 = sand.u32 %s37, 1
        %s369 = sand.u32 %s37, 1
        %s370 = smul.addr %s369, 320
        %s371 = scalar_lea.vmem [#allocation3], %s370
        // Predicated region
        $region73: #{tpu_custom_call.1} parent=71 // pred_check
          %p372 = pneg %p50
        $region74: #{tpu_custom_call.1} parent=71 // pred_check_branch
          %374 = sbr.rel (%p372) target = $region76
        $region75: #{tpu_custom_call.1} parent=71 // pred_region
          _
        $region76: #{tpu_custom_call.1} parent=71 // pred_fallthru
          _
        %s375 = sand.u32 %s37, 1
        %s376 = sand.u32 %s37, 1
        %s377 = smul.addr %s376, 320
        %s378 = scalar_lea.vmem [#allocation3], %s377
        %p379 = pneg %p50
        %p380 = pneg %p47
        %p381 = pneg %p76
        %p382 = pneg %p73
        %s383 = sand.u32 %s63, 1
        %s384 = scalar_lea.sflag [#allocation5], %s383
        %s385 = sand.u32 %s63, 1
        %s386 = scalar_lea.vmem [#allocation4], %s385
        %s387 = smul.u32 40, %s20
        %s388 = ssub.s32 38, %s387
        %s389 = smul.u32 128, %s388
        %p390 = scmp.eq.s32.totalorder %s20, 0
        // Predicated region
        $region77: #{tpu_custom_call.1} parent=71 // pred_check
          %p391 = pneg %p390
        $region78: #{tpu_custom_call.1} parent=71 // pred_check_branch
          %393 = sbr.rel (%p391) target = $region80
        $region79: #{tpu_custom_call.1} parent=71 // pred_region
          %394 = vst [vmem:[#allocation2] sm:$0xff] 0.0
        $region80: #{tpu_custom_call.1} parent=71 // pred_fallthru
          _
        %p395 = scmp.ne.s32.totalorder %s20, 0
        // Predicated region
        $region81: #{tpu_custom_call.1} parent=71 // pred_check
          %p396 = pneg %p395
        $region82: #{tpu_custom_call.1} parent=71 // pred_check_branch
          %398 = sbr.rel (%p396) target = $region84
        $region83: #{tpu_custom_call.1} parent=71 // pred_region
          %v399 = vld [vmem:[%s371] sm:$0xff]
          %v400 = vld [vmem:[%s371 + $0x8] sm:$0xff]
          %v401 = vld [vmem:[%s371 + $0x10] sm:$0xff]
          %v402 = vld [vmem:[%s371 + $0x18] sm:$0xff]
          %v403 = vld [vmem:[%s371 + $0x20] sm:$0xff]
          %v404 = vadd.f32 %v399, %v400
          %v405 = vadd.f32 %v404, %v401
          %v406 = vadd.f32 %v405, %v402
          %v407 = vadd.f32 %v406, %v403
          %v408 = vadd.f32 %v407, 0.0
          %v409 = vld [vmem:[%s371 + $0x28] sm:$0xff]
          %v410 = vld [vmem:[%s371 + $0x30] sm:$0xff]
          %v411 = vld [vmem:[%s371 + $0x38] sm:$0xff]
          %v412 = vld [vmem:[%s371 + $0x40] sm:$0xff]
          %v413 = vld [vmem:[%s371 + $0x48] sm:$0xff]
          %v414 = vadd.f32 %v409, %v410
          %v415 = vadd.f32 %v414, %v411
          %v416 = vadd.f32 %v415, %v412
          %v417 = vadd.f32 %v416, %v413
          %v418 = vadd.f32 %v408, %v417
          %v419 = vld [vmem:[%s371 + $0x50] sm:$0xff]
          %v420 = vld [vmem:[%s371 + $0x58] sm:$0xff]
          %v421 = vld [vmem:[%s371 + $0x60] sm:$0xff]
          %v422 = vld [vmem:[%s371 + $0x68] sm:$0xff]
          %v423 = vld [vmem:[%s371 + $0x70] sm:$0xff]
          %v424 = vadd.f32 %v419, %v420
          %v425 = vadd.f32 %v424, %v421
          %v426 = vadd.f32 %v425, %v422
          %v427 = vadd.f32 %v426, %v423
          %v428 = vadd.f32 %v418, %v427
          %v429 = vld [vmem:[%s371 + $0x78] sm:$0xff]
          %v430 = vld [vmem:[%s371 + $0x80] sm:$0xff]
          %v431 = vld [vmem:[%s371 + $0x88] sm:$0xff]
          %v432 = vld [vmem:[%s371 + $0x90] sm:$0xff]
          %v433 = vld [vmem:[%s371 + $0x98] sm:$0xff]
          %v434 = vadd.f32 %v429, %v430
          %v435 = vadd.f32 %v434, %v431
          %v436 = vadd.f32 %v435, %v432
          %v437 = vadd.f32 %v436, %v433
          %v438 = vadd.f32 %v428, %v437
          %v439 = vld [vmem:[%s371 + $0xa0] sm:$0xff]
          %v440 = vld [vmem:[%s371 + $0xa8] sm:$0xff]
          %v441 = vld [vmem:[%s371 + $0xb0] sm:$0xff]
          %v442 = vld [vmem:[%s371 + $0xb8] sm:$0xff]
          %v443 = vld [vmem:[%s371 + $0xc0] sm:$0xff]
          %v444 = vadd.f32 %v439, %v440
          %v445 = vadd.f32 %v444, %v441
          %v446 = vadd.f32 %v445, %v442
          %v447 = vadd.f32 %v446, %v443
          %v448 = vadd.f32 %v438, %v447
          %v449 = vld [vmem:[%s371 + $0xc8] sm:$0xff]
          %v450 = vld [vmem:[%s371 + $0xd0] sm:$0xff]
          %v451 = vld [vmem:[%s371 + $0xd8] sm:$0xff]
          %v452 = vld [vmem:[%s371 + $0xe0] sm:$0xff]
          %v453 = vld [vmem:[%s371 + $0xe8] sm:$0xff]
          %v454 = vadd.f32 %v449, %v450
          %v455 = vadd.f32 %v454, %v451
          %v456 = vadd.f32 %v455, %v452
          %v457 = vadd.f32 %v456, %v453
          %v458 = vadd.f32 %v448, %v457
          %v459 = vld [vmem:[%s371 + $0xf0] sm:$0xff]
          %v460 = vld [vmem:[%s371 + $0xf8] sm:$0xff]
          %v461 = vld [vmem:[%s371 + $0x100] sm:$0xff]
          %v462 = vld [vmem:[%s371 + $0x108] sm:$0xff]
          %v463 = vld [vmem:[%s371 + $0x110] sm:$0xff]
          %v464 = vadd.f32 %v459, %v460
          %v465 = vadd.f32 %v464, %v461
          %v466 = vadd.f32 %v465, %v462
          %v467 = vadd.f32 %v466, %v463
          %v468 = vadd.f32 %v458, %v467
          %v469 = vld [vmem:[%s371 + $0x118] sm:$0xff]
          %v470 = vld [vmem:[%s371 + $0x120] sm:$0xff]
          %v471 = vld [vmem:[%s371 + $0x128] sm:$0xff]
          %v472 = vld [vmem:[%s371 + $0x130] sm:$0xff]
          %v473 = vld [vmem:[%s371 + $0x138] sm:$0xff]
          %v474 = vadd.f32 %v469, %v470
          %v475 = vadd.f32 %v474, %v471
          %v476 = vadd.f32 %v475, %v472
          %v477 = vadd.f32 %v476, %v473
          %v478 = vadd.f32 %v468, %v477
          %v479 = vld [vmem:[#allocation2] sm:$0xff]
          %v480 = vadd.f32 %v479, %v478
          %481 = vst [vmem:[#allocation2] sm:$0xff] %v480
        $region84: #{tpu_custom_call.1} parent=71 // pred_fallthru
          _
        // Predicated region
        $region85: #{tpu_custom_call.1} parent=71 // pred_check
          %p482 = pneg %p390
        $region86: #{tpu_custom_call.1} parent=71 // pred_check_branch
          %484 = sbr.rel (%p482) target = $region88
        $region87: #{tpu_custom_call.1} parent=71 // pred_region
          %v485 = vlaneseq
          %v486 = vshrl.u32 %v485, 7
          %v487 = vadd.s32 %v486, 8
          %v488 = vadd.s32 %v486, 16
          %v489 = vadd.s32 %v486, 24
          %v490 = vadd.s32 %v486, 32
          %s491 = smul.u32 %s20, 320
          %v492 = vld [vmem:[%s371] sm:$0xff]
          %v493 = vld [vmem:[%s371 + $0x8] sm:$0xff]
          %v494 = vld [vmem:[%s371 + $0x10] sm:$0xff]
          %v495 = vld [vmem:[%s371 + $0x18] sm:$0xff]
          %v496 = vld [vmem:[%s371 + $0x20] sm:$0xff]
          %v497 = vstv %s491
          %v498 = vadd.s32 %v497, %v486
          %v499 = vadd.s32 %v497, %v487
          %v500 = vadd.s32 %v497, %v488
          %v501 = vadd.s32 %v497, %v489
          %v502 = vadd.s32 %v497, %v490
          %vm503 = vcmp.lt.s32.totalorder %v498, 300
          %vm504 = vcmp.lt.s32.totalorder %v499, 300
          %vm505 = vcmp.lt.s32.totalorder %v500, 300
          %vm506 = vcmp.lt.s32.totalorder %v501, 300
          %vm507 = vcmp.lt.s32.totalorder %v502, 300
          %v508 = vsel %vm503, %v492, 0.0
          %v509 = vsel %vm504, %v493, 0.0
          %v510 = vsel %vm505, %v494, 0.0
          %v511 = vsel %vm506, %v495, 0.0
          %v512 = vsel %vm507, %v496, 0.0
          %v513 = vadd.f32 %v508, %v509
          %v514 = vadd.f32 %v513, %v510
          %v515 = vadd.f32 %v514, %v511
          %v516 = vadd.f32 %v515, %v512
          %v517 = vadd.f32 %v516, 0.0
          %v518 = vld [vmem:[%s371 + $0x28] sm:$0xff]
          %v519 = vld [vmem:[%s371 + $0x30] sm:$0xff]
          %v520 = vld [vmem:[%s371 + $0x38] sm:$0xff]
          %v521 = vld [vmem:[%s371 + $0x40] sm:$0xff]
          %v522 = vld [vmem:[%s371 + $0x48] sm:$0xff]
          %v523 = vadd.s32 %v486, 40
          %v524 = vadd.s32 %v487, 40
          %v525 = vadd.s32 %v488, 40
          %v526 = vadd.s32 %v489, 40
          %v527 = vadd.s32 %v490, 40
          %v528 = vadd.s32 %v497, %v523
          %v529 = vadd.s32 %v497, %v524
          %v530 = vadd.s32 %v497, %v525
          %v531 = vadd.s32 %v497, %v526
          %v532 = vadd.s32 %v497, %v527
          %vm533 = vcmp.lt.s32.totalorder %v528, 300
          %vm534 = vcmp.lt.s32.totalorder %v529, 300
          %vm535 = vcmp.lt.s32.totalorder %v530, 300
          %vm536 = vcmp.lt.s32.totalorder %v531, 300
          %vm537 = vcmp.lt.s32.totalorder %v532, 300
          %v538 = vsel %vm533, %v518, 0.0
          %v539 = vsel %vm534, %v519, 0.0
          %v540 = vsel %vm535, %v520, 0.0
          %v541 = vsel %vm536, %v521, 0.0
          %v542 = vsel %vm537, %v522, 0.0
          %v543 = vadd.f32 %v538, %v539
          %v544 = vadd.f32 %v543, %v540
          %v545 = vadd.f32 %v544, %v541
          %v546 = vadd.f32 %v545, %v542
          %v547 = vadd.f32 %v517, %v546
          %v548 = vld [vmem:[%s371 + $0x50] sm:$0xff]
          %v549 = vld [vmem:[%s371 + $0x58] sm:$0xff]
          %v550 = vld [vmem:[%s371 + $0x60] sm:$0xff]
          %v551 = vld [vmem:[%s371 + $0x68] sm:$0xff]
          %v552 = vld [vmem:[%s371 + $0x70] sm:$0xff]
          %v553 = vadd.s32 %v486, 80
          %v554 = vadd.s32 %v487, 80
          %v555 = vadd.s32 %v488, 80
          %v556 = vadd.s32 %v489, 80
          %v557 = vadd.s32 %v490, 80
          %v558 = vadd.s32 %v497, %v553
          %v559 = vadd.s32 %v497, %v554
          %v560 = vadd.s32 %v497, %v555
          %v561 = vadd.s32 %v497, %v556
          %v562 = vadd.s32 %v497, %v557
          %vm563 = vcmp.lt.s32.totalorder %v558, 300
          %vm564 = vcmp.lt.s32.totalorder %v559, 300
          %vm565 = vcmp.lt.s32.totalorder %v560, 300
          %vm566 = vcmp.lt.s32.totalorder %v561, 300
          %vm567 = vcmp.lt.s32.totalorder %v562, 300
          %v568 = vsel %vm563, %v548, 0.0
          %v569 = vsel %vm564, %v549, 0.0
          %v570 = vsel %vm565, %v550, 0.0
          %v571 = vsel %vm566, %v551, 0.0
          %v572 = vsel %vm567, %v552, 0.0
          %v573 = vadd.f32 %v568, %v569
          %v574 = vadd.f32 %v573, %v570
          %v575 = vadd.f32 %v574, %v571
          %v576 = vadd.f32 %v575, %v572
          %v577 = vadd.f32 %v547, %v576
          %v578 = vld [vmem:[%s371 + $0x78] sm:$0xff]
          %v579 = vld [vmem:[%s371 + $0x80] sm:$0xff]
          %v580 = vld [vmem:[%s371 + $0x88] sm:$0xff]
          %v581 = vld [vmem:[%s371 + $0x90] sm:$0xff]
          %v582 = vld [vmem:[%s371 + $0x98] sm:$0xff]
          %v583 = vadd.s32 %v486, 120
          %v584 = vadd.s32 %v487, 120
          %v585 = vadd.s32 %v488, 120
          %v586 = vadd.s32 %v489, 120
          %v587 = vadd.s32 %v490, 120
          %v588 = vadd.s32 %v497, %v583
          %v589 = vadd.s32 %v497, %v584
          %v590 = vadd.s32 %v497, %v585
          %v591 = vadd.s32 %v497, %v586
          %v592 = vadd.s32 %v497, %v587
          %vm593 = vcmp.lt.s32.totalorder %v588, 300
          %vm594 = vcmp.lt.s32.totalorder %v589, 300
          %vm595 = vcmp.lt.s32.totalorder %v590, 300
          %vm596 = vcmp.lt.s32.totalorder %v591, 300
          %vm597 = vcmp.lt.s32.totalorder %v592, 300
          %v598 = vsel %vm593, %v578, 0.0
          %v599 = vsel %vm594, %v579, 0.0
          %v600 = vsel %vm595, %v580, 0.0
          %v601 = vsel %vm596, %v581, 0.0
          %v602 = vsel %vm597, %v582, 0.0
          %v603 = vadd.f32 %v598, %v599
          %v604 = vadd.f32 %v603, %v600
          %v605 = vadd.f32 %v604, %v601
          %v606 = vadd.f32 %v605, %v602
          %v607 = vadd.f32 %v577, %v606
          %v608 = vld [vmem:[%s371 + $0xa0] sm:$0xff]
          %v609 = vld [vmem:[%s371 + $0xa8] sm:$0xff]
          %v610 = vld [vmem:[%s371 + $0xb0] sm:$0xff]
          %v611 = vld [vmem:[%s371 + $0xb8] sm:$0xff]
          %v612 = vld [vmem:[%s371 + $0xc0] sm:$0xff]
          %v613 = vadd.s32 %v486, 160
          %v614 = vadd.s32 %v487, 160
          %v615 = vadd.s32 %v488, 160
          %v616 = vadd.s32 %v489, 160
          %v617 = vadd.s32 %v490, 160
          %v618 = vadd.s32 %v497, %v613
          %v619 = vadd.s32 %v497, %v614
          %v620 = vadd.s32 %v497, %v615
          %v621 = vadd.s32 %v497, %v616
          %v622 = vadd.s32 %v497, %v617
          %vm623 = vcmp.lt.s32.totalorder %v618, 300
          %vm624 = vcmp.lt.s32.totalorder %v619, 300
          %vm625 = vcmp.lt.s32.totalorder %v620, 300
          %vm626 = vcmp.lt.s32.totalorder %v621, 300
          %vm627 = vcmp.lt.s32.totalorder %v622, 300
          %v628 = vsel %vm623, %v608, 0.0
          %v629 = vsel %vm624, %v609, 0.0
          %v630 = vsel %vm625, %v610, 0.0
          %v631 = vsel %vm626, %v611, 0.0
          %v632 = vsel %vm627, %v612, 0.0
          %v633 = vadd.f32 %v628, %v629
          %v634 = vadd.f32 %v633, %v630
          %v635 = vadd.f32 %v634, %v631
          %v636 = vadd.f32 %v635, %v632
          %v637 = vadd.f32 %v607, %v636
          %v638 = vld [vmem:[%s371 + $0xc8] sm:$0xff]
          %v639 = vld [vmem:[%s371 + $0xd0] sm:$0xff]
          %v640 = vld [vmem:[%s371 + $0xd8] sm:$0xff]
          %v641 = vld [vmem:[%s371 + $0xe0] sm:$0xff]
          %v642 = vld [vmem:[%s371 + $0xe8] sm:$0xff]
          %v643 = vadd.s32 %v486, 200
          %v644 = vadd.s32 %v487, 200
          %v645 = vadd.s32 %v488, 200
          %v646 = vadd.s32 %v489, 200
          %v647 = vadd.s32 %v490, 200
          %v648 = vadd.s32 %v497, %v643
          %v649 = vadd.s32 %v497, %v644
          %v650 = vadd.s32 %v497, %v645
          %v651 = vadd.s32 %v497, %v646
          %v652 = vadd.s32 %v497, %v647
          %vm653 = vcmp.lt.s32.totalorder %v648, 300
          %vm654 = vcmp.lt.s32.totalorder %v649, 300
          %vm655 = vcmp.lt.s32.totalorder %v650, 300
          %vm656 = vcmp.lt.s32.totalorder %v651, 300
          %vm657 = vcmp.lt.s32.totalorder %v652, 300
          %v658 = vsel %vm653, %v638, 0.0
          %v659 = vsel %vm654, %v639, 0.0
          %v660 = vsel %vm655, %v640, 0.0
          %v661 = vsel %vm656, %v641, 0.0
          %v662 = vsel %vm657, %v642, 0.0
          %v663 = vadd.f32 %v658, %v659
          %v664 = vadd.f32 %v663, %v660
          %v665 = vadd.f32 %v664, %v661
          %v666 = vadd.f32 %v665, %v662
          %v667 = vadd.f32 %v637, %v666
          %v668 = vld [vmem:[%s371 + $0xf0] sm:$0xff]
          %v669 = vld [vmem:[%s371 + $0xf8] sm:$0xff]
          %v670 = vld [vmem:[%s371 + $0x100] sm:$0xff]
          %v671 = vld [vmem:[%s371 + $0x108] sm:$0xff]
          %v672 = vld [vmem:[%s371 + $0x110] sm:$0xff]
          %v673 = vadd.s32 %v486, 240
          %v674 = vadd.s32 %v487, 240
          %v675 = vadd.s32 %v488, 240
          %v676 = vadd.s32 %v489, 240
          %v677 = vadd.s32 %v490, 240
          %v678 = vadd.s32 %v497, %v673
          %v679 = vadd.s32 %v497, %v674
          %v680 = vadd.s32 %v497, %v675
          %v681 = vadd.s32 %v497, %v676
          %v682 = vadd.s32 %v497, %v677
          %vm683 = vcmp.lt.s32.totalorder %v678, 300
          %vm684 = vcmp.lt.s32.totalorder %v679, 300
          %vm685 = vcmp.lt.s32.totalorder %v680, 300
          %vm686 = vcmp.lt.s32.totalorder %v681, 300
          %vm687 = vcmp.lt.s32.totalorder %v682, 300
          %v688 = vsel %vm683, %v668, 0.0
          %v689 = vsel %vm684, %v669, 0.0
          %v690 = vsel %vm685, %v670, 0.0
          %v691 = vsel %vm686, %v671, 0.0
          %v692 = vsel %vm687, %v672, 0.0
          %v693 = vadd.f32 %v688, %v689
          %v694 = vadd.f32 %v693, %v690
          %v695 = vadd.f32 %v694, %v691
          %v696 = vadd.f32 %v695, %v692
          %v697 = vadd.f32 %v667, %v696
          %v698 = vld [vmem:[%s371 + $0x118] sm:$0xff]
          %v699 = vld [vmem:[%s371 + $0x120] sm:$0xff]
          %v700 = vld [vmem:[%s371 + $0x128] sm:$0xff]
          %v701 = vld [vmem:[%s371 + $0x130] sm:$0xff]
          %v702 = vld [vmem:[%s371 + $0x138] sm:$0xff]
          %v703 = vadd.s32 %v486, 280
          %v704 = vadd.s32 %v487, 280
          %v705 = vadd.s32 %v488, 280
          %v706 = vadd.s32 %v489, 280
          %v707 = vadd.s32 %v490, 280
          %v708 = vadd.s32 %v497, %v703
          %v709 = vadd.s32 %v497, %v704
          %v710 = vadd.s32 %v497, %v705
          %v711 = vadd.s32 %v497, %v706
          %v712 = vadd.s32 %v497, %v707
          %vm713 = vcmp.lt.s32.totalorder %v708, 300
          %vm714 = vcmp.lt.s32.totalorder %v709, 300
          %vm715 = vcmp.lt.s32.totalorder %v710, 300
          %vm716 = vcmp.lt.s32.totalorder %v711, 300
          %vm717 = vcmp.lt.s32.totalorder %v712, 300
          %v718 = vsel %vm713, %v698, 0.0
          %v719 = vsel %vm714, %v699, 0.0
          %v720 = vsel %vm715, %v700, 0.0
          %v721 = vsel %vm716, %v701, 0.0
          %v722 = vsel %vm717, %v702, 0.0
          %v723 = vadd.f32 %v718, %v719
          %v724 = vadd.f32 %v723, %v720
          %v725 = vadd.f32 %v724, %v721
          %v726 = vadd.f32 %v725, %v722
          %v727 = vadd.f32 %v697, %v726
          %v728 = vld [vmem:[#allocation2] sm:$0xff]
          %v729 = vadd.f32 %v728, %v727
          %730 = vst [vmem:[#allocation2] sm:$0xff] %v729
          %v731 = vld [vmem:[#allocation2] sm:$0xff]
          %v732 = vrot.slane %v731, 4
          %v733 = vadd.f32 %v731, %v732
          %v734 = vrot.slane %v733, 2
          %v735 = vadd.f32 %v733, %v734
          %v736 = vrot.slane %v735, 1
          %v737 = vadd.f32 %v735, %v736
          %v738 = vmul.f32 %v737, 0.0033333334
          %v739 = vxor.u32 %v738, 2147483648
          %v740 = vmul.f32 %v739, 1.442695
          %v741 = vpow.pop %v740
          %v742 = vadd.f32 %v741, 1.0
          %v743 = vrcp.pop %v742
          %v744 = vmul.f32 1.0, %v743
          %745 = vst [vmem:[%s386] sm:$0x1] %v744
        $region88: #{tpu_custom_call.1} parent=71 // pred_fallthru
          _
        %s746 = sand.u32 %s63, 1
        %s747 = scalar_lea.sflag [#allocation5], %s746
        %s748 = sand.u32 %s63, 1
        %s749 = scalar_lea.vmem [#allocation4], %s748
        // Predicated region
        $region89: #{tpu_custom_call.1} parent=71 // pred_check
          %p750 = pneg %p73
        $region90: #{tpu_custom_call.1} parent=71 // pred_check_branch
          %752 = sbr.rel (%p750) target = $region92
        $region91: #{tpu_custom_call.1} parent=71 // pred_region
          %s754 = ssub.s32 16, 16
          %755 = vsyncadd %s747, %s754
          %s756 = smul.addr %s19, 16
          %s757 = scalar_lea.hbm %s1, %s756
          %s759 = sshll.u32 %s749, 4
          %s760 = int_to_ptr.vmem [resolvable:$true] %s759
          %762 = dma.vmem_to_hbm [thread:$0]  %s760, 16, %s757, %s747
        $region92: #{tpu_custom_call.1} parent=71 // pred_fallthru
          _
      $region72: #{tpu_custom_call.1} parent=5 // pred_fallthru
        _
      %p763 = scmp.le.s32.totalorder 2, %s10
      // Predicated region
      $region93: #{tpu_custom_call.1} parent=5 // pred_check
        %p764 = pneg %p763
      $region94: #{tpu_custom_call.1} parent=5 // pred_check_branch
        %766 = sbr.rel (%p764) target = $region96
      $region95: #{tpu_custom_call.1} parent=5 // pred_region
        %s767 = ssub.s32 %s10, 2
        // Predicated region
        $region97: #{tpu_custom_call.1} parent=95 // pred_check
          %p768 = pneg %p79
        $region98: #{tpu_custom_call.1} parent=95 // pred_check_branch
          %770 = sbr.rel (%p768) target = $region100
        $region99: #{tpu_custom_call.1} parent=95 // pred_region
          %s771 = sand.u32 %s64, 1
          %s772 = scalar_lea.sflag [#allocation5], %s771
          %s773 = sand.u32 %s64, 1
          %s774 = scalar_lea.vmem [#allocation4], %s773
          %775 = dma.done %s772, 16
        $region100: #{tpu_custom_call.1} parent=95 // pred_fallthru
          _
      $region96: #{tpu_custom_call.1} parent=5 // pred_fallthru
        _
    $region6: #{tpu_custom_call.1} parent=1 // loop_footer
      %s14 = sadd.s32 1, %s10
    $region7: #{tpu_custom_call.1} parent=1 // loop_footer_branch
      %9 = sbr.rel target = $region3
    $region8: #{tpu_custom_call.1} parent=1 // loop_exit
      _
    %776 = vsyncpa [#allocation5], 1
    %s777 = scalar_lea.sflag [#allocation5], 1
    %778 = vsyncpa %s777, 1

</llo_original>
